<compile_context>
chip_gen: v7x
topology: tpu7x:2x2x1
jax: 0.10.0
libtpu: 0.0.40
codegen_flags: <defaults>
</compile_context>

<pallas_src>
import jax
import jax.numpy as jnp
from jax.experimental import pallas as pl
from jax.experimental.pallas import tpu as pltpu


def mlp_kernel(x_ref, w1_ref, b1_ref, w2_ref, b2_ref, o_ref):
    # fc1: (BT, D) @ (D, 128) on the MXU, f32 accumulate, + bias, ReLU.
    h = jnp.dot(x_ref[...], w1_ref[...], preferred_element_type=jnp.float32)
    h = jnp.maximum(h + b1_ref[...], 0.0)                  # (BT, 128)

    # fc2 as VPU mul + reduce on the transposed activations so the stored
    # output is lane-dense (last dim = BT) instead of a width-1 masked store.
    ht = h.T                                               # (128, BT)  XLU
    o = jnp.sum(ht * w2_ref[...], axis=0, keepdims=True)   # (1, BT)    VPU/XLU
    o_ref[...] = (o + b2_ref[...]).astype(o_ref.dtype)


def neural_network_forward(x, w1, b1, w2, b2, *, block_b=256):
    """Forward pass equivalent to the PyTorch NeuralNetwork module.

    x  : (B, D)   float32
    w1 : (D, 128) float32   (PyTorch fc1.weight.T)
    b1 : (1, 128) float32
    w2 : (128, 1) float32   (PyTorch fc2.weight.T)
    b2 : (1, 1)   float32
    returns (B, 1) float32
    """
    B, D = x.shape
    H = w1.shape[1]

    BT = int(block_b)               # batch tile (multiple of 128); sweepable.
    n_tiles = pl.cdiv(B, BT)
    B_pad = n_tiles * BT
    if B_pad != B:                  # pad batch so the grid divides evenly
        x = jnp.pad(x, ((0, B_pad - B), (0, 0)))

    # Advisory cost hint for XLA scheduling around the custom call.
    cost = pl.CostEstimate(
        flops=2 * B_pad * D * H + 3 * B_pad * H,
        transcendentals=0,
        bytes_accessed=4 * (B_pad * D + D * H + 2 * H + 1 + B_pad),
    )

    out_flat = pl.pallas_call(
        mlp_kernel,
        out_shape=jax.ShapeDtypeStruct((1, B_pad), jnp.float32),
        grid=(n_tiles,),
        in_specs=[
            pl.BlockSpec((BT, D), lambda i: (i, 0)),   # x tile, pipelined
            pl.BlockSpec((D, H), lambda i: (0, 0)),    # w1 resident in VMEM
            pl.BlockSpec((1, H), lambda i: (0, 0)),    # b1 resident
            pl.BlockSpec((H, 1), lambda i: (0, 0)),    # w2 resident
            pl.BlockSpec((1, 1), lambda i: (0, 0)),    # b2 resident
        ],
        out_specs=pl.BlockSpec((1, BT), lambda i: (0, i)),  # lane-dense output
        compiler_params=pltpu.CompilerParams(
            dimension_semantics=("parallel",),
        ),
        cost_estimate=cost,
    )(x, w1, b1, w2, b2)

    # TODO(synk): for very large D, add a K-grid axis with an f32 accumulator
    # instead of keeping the full (D, 128) weight block resident in VMEM.
    return out_flat[0, :B].reshape(B, 1)


def init_params(key, input_size, hidden=128, out=1):
    """Deterministic init mimicking nn.Linear's U(-1/sqrt(fan_in), 1/sqrt(fan_in))."""
    k1, k2, k3, k4 = jax.random.split(key, 4)
    lim1 = 1.0 / jnp.sqrt(jnp.float32(input_size))
    lim2 = 1.0 / jnp.sqrt(jnp.float32(hidden))
    w1 = jax.random.uniform(k1, (input_size, hidden), jnp.float32, -lim1, lim1)
    b1 = jax.random.uniform(k2, (1, hidden), jnp.float32, -lim1, lim1)
    w2 = jax.random.uniform(k3, (hidden, out), jnp.float32, -lim2, lim2)
    b2 = jax.random.uniform(k4, (1, out), jnp.float32, -lim2, lim2)
    return w1, b1, w2, b2


if __name__ == "__main__":
    key = jax.random.PRNGKey(0)
    kx, kp = jax.random.split(key)

    batch = 16
    input_size = 32

    x = jax.random.normal(kx, (batch, input_size), jnp.float32)
    w1, b1, w2, b2 = init_params(kp, input_size)

    y = neural_network_forward(x, w1, b1, w2, b2)
    y = jax.block_until_ready(y)

    # Reference in plain JAX (same math as the PyTorch module).
    ref = jnp.maximum(x @ w1 + b1, 0.0) @ w2 + b2
    assert y.shape == (batch, 1)
    assert jnp.allclose(y, ref, atol=1e-5, rtol=1e-5)

    print("KERNEL_OK")
</pallas_src>

<mosaic_0001>
module attributes {stable_mosaic.version = 11 : i64} {
  func.func @mlp_kernel(%arg0: i32, %arg1: memref<256x32xf32, #tpu.memory_space<vmem>>, %arg2: memref<32x128xf32, #tpu.memory_space<vmem>>, %arg3: memref<1x128xf32, #tpu.memory_space<vmem>>, %arg4: memref<128x1xf32, #tpu.memory_space<vmem>>, %arg5: memref<1x1xf32, #tpu.memory_space<vmem>>, %arg6: memref<1x256xf32, #tpu.memory_space<vmem>>) attributes {dimension_semantics = [#tpu.dimension_semantics<parallel>], iteration_bounds = array<i64: 1>, scalar_prefetch = 0 : i64, scratch_operands = 0 : i64, tpu.core_type = #tpu.core_type<tc>, window_params = [{transform_indices = @transform_0, window_bounds = array<i64: 256, 32>}, {pipeline_mode = #tpu.pipeline_mode<synchronous>, transform_indices = @transform_1, window_bounds = array<i64: 32, 128>}, {pipeline_mode = #tpu.pipeline_mode<synchronous>, transform_indices = @transform_2, window_bounds = array<i64: 1, 128>}, {pipeline_mode = #tpu.pipeline_mode<synchronous>, transform_indices = @transform_3, window_bounds = array<i64: 128, 1>}, {pipeline_mode = #tpu.pipeline_mode<synchronous>, transform_indices = @transform_4, window_bounds = array<i64: 1, 1>}, {transform_indices = @transform_5, window_bounds = array<i64: 1, 256>}]} {
    %c0 = arith.constant 0 : index
    %c0_0 = arith.constant 0 : index
    %0 = vector.load %arg1[%c0, %c0_0] : memref<256x32xf32, #tpu.memory_space<vmem>>, vector<256x32xf32>
    %c0_1 = arith.constant 0 : index
    %c0_2 = arith.constant 0 : index
    %1 = vector.load %arg2[%c0_1, %c0_2] : memref<32x128xf32, #tpu.memory_space<vmem>>, vector<32x128xf32>
    %cst = arith.constant dense<0.000000e+00> : vector<256x128xf32>
    %2 = tpu.matmul %0, %1, %cst {dimension_numbers = #tpu.dot_dimension_numbers<[1], [0], [0], [1], [0, 0, 1, 1], [], []>} : vector<256x32xf32>, vector<32x128xf32>, vector<256x128xf32> -> vector<256x128xf32>
    %c0_3 = arith.constant 0 : index
    %c0_4 = arith.constant 0 : index
    %3 = vector.load %arg3[%c0_3, %c0_4] : memref<1x128xf32, #tpu.memory_space<vmem>>, vector<1x128xf32>
    %4 = vector.broadcast %3 : vector<1x128xf32> to vector<256x128xf32>
    %5 = arith.addf %2, %4 : vector<256x128xf32>
    %cst_5 = arith.constant 0.000000e+00 : f32
    %6 = vector.broadcast %cst_5 : f32 to vector<256x128xf32>
    %7 = arith.maximumf %5, %6 : vector<256x128xf32>
    %8 = tpu.transpose %7, [1, 0] : vector<256x128xf32> -> vector<128x256xf32>
    %c0_6 = arith.constant 0 : index
    %c0_7 = arith.constant 0 : index
    %9 = vector.load %arg4[%c0_6, %c0_7] : memref<128x1xf32, #tpu.memory_space<vmem>>, vector<128x1xf32>
    %10 = vector.broadcast %9 : vector<128x1xf32> to vector<128x256xf32>
    %11 = arith.mulf %8, %10 : vector<128x256xf32>
    %cst_8 = arith.constant dense<0.000000e+00> : vector<256xf32>
    %12 = vector.multi_reduction <add>, %11, %cst_8 [0] : vector<128x256xf32> to vector<256xf32>
    %13 = vector.shape_cast %12 : vector<256xf32> to vector<1x256xf32>
    %c0_9 = arith.constant 0 : index
    %c0_10 = arith.constant 0 : index
    %14 = vector.load %arg5[%c0_9, %c0_10] : memref<1x1xf32, #tpu.memory_space<vmem>>, vector<1x1xf32>
    %15 = vector.broadcast %14 : vector<1x1xf32> to vector<1x256xf32>
    %16 = arith.addf %13, %15 : vector<1x256xf32>
    %c0_11 = arith.constant 0 : index
    %c0_12 = arith.constant 0 : index
    %17 = vector.load %arg6[%c0_11, %c0_12] : memref<1x256xf32, #tpu.memory_space<vmem>>, vector<1x256xf32>
    tpu.vector_store %arg6[%c0_11, %c0_12], %16 {strides = array<i32>} : memref<1x256xf32, #tpu.memory_space<vmem>>, vector<1x256xf32>,
    return
  }
  func.func @transform_0(%arg0: i32) -> (i32, i32) {
    %c0_i32 = arith.constant 0 : i32
    %c0_i32_0 = arith.constant 0 : i32
    return %arg0, %c0_i32 : i32, i32
  }
  func.func @transform_1(%arg0: i32) -> (i32, i32) {
    %c0_i32 = arith.constant 0 : i32
    %c0_i32_0 = arith.constant 0 : i32
    %c0_i32_1 = arith.constant 0 : i32
    return %c0_i32, %c0_i32_0 : i32, i32
  }
  func.func @transform_2(%arg0: i32) -> (i32, i32) {
    %c0_i32 = arith.constant 0 : i32
    %c0_i32_0 = arith.constant 0 : i32
    %c0_i32_1 = arith.constant 0 : i32
    return %c0_i32, %c0_i32_0 : i32, i32
  }
  func.func @transform_3(%arg0: i32) -> (i32, i32) {
    %c0_i32 = arith.constant 0 : i32
    %c0_i32_0 = arith.constant 0 : i32
    %c0_i32_1 = arith.constant 0 : i32
    return %c0_i32, %c0_i32_0 : i32, i32
  }
  func.func @transform_4(%arg0: i32) -> (i32, i32) {
    %c0_i32 = arith.constant 0 : i32
    %c0_i32_0 = arith.constant 0 : i32
    %c0_i32_1 = arith.constant 0 : i32
    return %c0_i32, %c0_i32_0 : i32, i32
  }
  func.func @transform_5(%arg0: i32) -> (i32, i32) {
    %c0_i32 = arith.constant 0 : i32
    %c0_i32_0 = arith.constant 0 : i32
    return %c0_i32, %arg0 : i32, i32
  }
}

</mosaic_0001>

<llo_original>
// kernel: tpu_custom_call.1
$region0: #{tpu_custom_call.1}
  #allocation0 [shape = 'u32[]', space=smem, size = 0x4, offset = 0x4, fixed_abs, tag = 'smem constant byte address 0x4 - core index']
  #allocation1 [shape = 'u32[144,128]{1,0:T(1,128)}', space=vmem, size = 0x12000, scoped, tag = 'internal scratch']
  #allocation2 [shape = 'f32[1,1]{1,0:T(1,128)S(1)}', space=vmem, size = 0x200, scoped, tag = 'scoped memory for tpu_custom_call.1']
  %s0 = inlined_call_operand.vmem [shape: f32[256,32], index: 0, kind: input, shape index: {}]
  %s1 = inlined_call_operand.vmem [shape: f32[32,128], index: 1, kind: input, shape index: {}]
  %s2 = inlined_call_operand.vmem [shape: f32[1,128], index: 2, kind: input, shape index: {}]
  %s3 = inlined_call_operand.vmem [shape: f32[128,1], index: 3, kind: input, shape index: {}]
  %s4 = inlined_call_operand.<no memory space> [shape: f32[1,1], index: 4, kind: input, shape index: {}]
  %s5 = inlined_call_operand.hbm [shape: f32[1,256], index: 5, kind: output, shape index: {}]
  %s6 = sld [smem:[#allocation0]]
  $region30: #{tpu_custom_call.1} parent=0
    _
  %s8 = ssub.s32 1, %s6
  %s9 = scalar_select 0, %s8, %s6
  %v10 = vstv %s4
  %11 = vst [vmem:[#allocation2] sm:$0x1] %v10
  $region1: #{tpu_custom_call.1} parent=0
    #allocation3 [shape = 'u8[1024]{0}', space=vmem, size = 0x400, scoped, tag = 'output window, operand 0, single buffered']
    #allocation4 [shape = 's32[1]{0}', space=sflag, size = 0x4, scoped, tag = 'scoped memory for tpu_custom_call.1']
    %12 = vsyncpa [#allocation4], 0
    // Predicated region
    $region2: #{tpu_custom_call.1} parent=1 // pred_check
      _
    $region3: #{tpu_custom_call.1} parent=1 // pred_check_branch
      %14 = sbr.rel (0) target = $region5
    $region4: #{tpu_custom_call.1} parent=1 // pred_region
      _
    $region5: #{tpu_custom_call.1} parent=1 // pred_fallthru
      _
    // Predicated region
    $region6: #{tpu_custom_call.1} parent=1 // pred_check
      _
    $region7: #{tpu_custom_call.1} parent=1 // pred_check_branch
      %16 = sbr.rel (0) target = $region9
    $region8: #{tpu_custom_call.1} parent=1 // pred_region
      _
    $region9: #{tpu_custom_call.1} parent=1 // pred_fallthru
      _
    // Predicated region
    $region10: #{tpu_custom_call.1} parent=1 // pred_check
      _
    $region11: #{tpu_custom_call.1} parent=1 // pred_check_branch
      %18 = sbr.rel (0) target = $region13
    $region12: #{tpu_custom_call.1} parent=1 // pred_region
      _
    $region13: #{tpu_custom_call.1} parent=1 // pred_fallthru
      _
    // Predicated region
    $region14: #{tpu_custom_call.1} parent=1 // pred_check
      _
    $region15: #{tpu_custom_call.1} parent=1 // pred_check_branch
      %20 = sbr.rel (0) target = $region17
    $region16: #{tpu_custom_call.1} parent=1 // pred_region
      _
    $region17: #{tpu_custom_call.1} parent=1 // pred_fallthru
      _
    // Predicated region
    $region18: #{tpu_custom_call.1} parent=1 // pred_check
      _
    $region19: #{tpu_custom_call.1} parent=1 // pred_check_branch
      %22 = sbr.rel (0) target = $region21
    $region20: #{tpu_custom_call.1} parent=1 // pred_region
      _
    $region21: #{tpu_custom_call.1} parent=1 // pred_fallthru
      _
    %v23 = vld [vmem:[%s0] sm:$0xff]
    %v24 = vld [vmem:[%s0 + $0x8] sm:$0xff]
    %v25 = vld [vmem:[%s0 + $0x10] sm:$0xff]
    %v26 = vld [vmem:[%s0 + $0x18] sm:$0xff]
    %v27 = vld [vmem:[%s0 + $0x20] sm:$0xff]
    %v28 = vld [vmem:[%s0 + $0x28] sm:$0xff]
    %v29 = vld [vmem:[%s0 + $0x30] sm:$0xff]
    %v30 = vld [vmem:[%s0 + $0x38] sm:$0xff]
    %v31 = vld [vmem:[%s0 + $0x40] sm:$0xff]
    %v32 = vld [vmem:[%s0 + $0x48] sm:$0xff]
    %v33 = vld [vmem:[%s0 + $0x50] sm:$0xff]
    %v34 = vld [vmem:[%s0 + $0x58] sm:$0xff]
    %v35 = vld [vmem:[%s0 + $0x60] sm:$0xff]
    %v36 = vld [vmem:[%s0 + $0x68] sm:$0xff]
    %v37 = vld [vmem:[%s0 + $0x70] sm:$0xff]
    %v38 = vld [vmem:[%s0 + $0x78] sm:$0xff]
    %v39 = vld [vmem:[%s0 + $0x80] sm:$0xff]
    %v40 = vld [vmem:[%s0 + $0x88] sm:$0xff]
    %v41 = vld [vmem:[%s0 + $0x90] sm:$0xff]
    %v42 = vld [vmem:[%s0 + $0x98] sm:$0xff]
    %v43 = vld [vmem:[%s0 + $0xa0] sm:$0xff]
    %v44 = vld [vmem:[%s0 + $0xa8] sm:$0xff]
    %v45 = vld [vmem:[%s0 + $0xb0] sm:$0xff]
    %v46 = vld [vmem:[%s0 + $0xb8] sm:$0xff]
    %v47 = vld [vmem:[%s0 + $0xc0] sm:$0xff]
    %v48 = vld [vmem:[%s0 + $0xc8] sm:$0xff]
    %v49 = vld [vmem:[%s0 + $0xd0] sm:$0xff]
    %v50 = vld [vmem:[%s0 + $0xd8] sm:$0xff]
    %v51 = vld [vmem:[%s0 + $0xe0] sm:$0xff]
    %v52 = vld [vmem:[%s0 + $0xe8] sm:$0xff]
    %v53 = vld [vmem:[%s0 + $0xf0] sm:$0xff]
    %v54 = vld [vmem:[%s0 + $0xf8] sm:$0xff]
    %v55 = vld [vmem:[%s1] sm:$0xff]
    %v56 = vld [vmem:[%s1 + $0x8] sm:$0xff]
    %v57 = vld [vmem:[%s1 + $0x10] sm:$0xff]
    %v58 = vld [vmem:[%s1 + $0x18] sm:$0xff]
    %v59 = vld [vmem:[%s2] sm:$0x1]
    %v61 = vlaneseq
    %v62 = vshrl.u32 %v61, 7
    %v63 = vsub.s32 0, %v62
    %v64 = vrot.slane %v59, %v63
    %vm66 = vcmask 261120
    %v68 = vsel %vm66, %v23, 0
    %v71 = vsel %vm66, %v24, 0
    %v74 = vsel %vm66, %v25, 0
    %v77 = vsel %vm66, %v26, 0
    %v80 = vsel %vm66, %v27, 0
    %v83 = vsel %vm66, %v28, 0
    %v86 = vsel %vm66, %v29, 0
    %v89 = vsel %vm66, %v30, 0
    %v92 = vsel %vm66, %v31, 0
    %v95 = vsel %vm66, %v32, 0
    %v98 = vsel %vm66, %v33, 0
    %v101 = vsel %vm66, %v34, 0
    %v104 = vsel %vm66, %v35, 0
    %v107 = vsel %vm66, %v36, 0
    %v110 = vsel %vm66, %v37, 0
    %v113 = vsel %vm66, %v38, 0
    %v116 = vsel %vm66, %v39, 0
    %v119 = vsel %vm66, %v40, 0
    %v122 = vsel %vm66, %v41, 0
    %v125 = vsel %vm66, %v42, 0
    %v128 = vsel %vm66, %v43, 0
    %v131 = vsel %vm66, %v44, 0
    %v134 = vsel %vm66, %v45, 0
    %v137 = vsel %vm66, %v46, 0
    %v140 = vsel %vm66, %v47, 0
    %v143 = vsel %vm66, %v48, 0
    %v146 = vsel %vm66, %v49, 0
    %v149 = vsel %vm66, %v50, 0
    %v152 = vsel %vm66, %v51, 0
    %v155 = vsel %vm66, %v52, 0
    %v158 = vsel %vm66, %v53, 0
    %v161 = vsel %vm66, %v54, 0
    %163 = vmatprep.subr.mxu0 0.0
    %164 = vmatpush1.msra.mxu0 %v55
    %165 = vmatprep.subr.mxu0 0.0
    %166 = vmatpush1.msra.mxu0 %v56
    %167 = vmatprep.subr.mxu0 0.0
    %168 = vmatpush1.msra.mxu0 %v57
    %169 = vmatprep.subr.mxu0 0.0
    %170 = vmatpush1.msra.mxu0 %v58
    %171 = vmatprep.subr.mxu0 0.0
    %172 = vmatpush1.msra.mxu0 0.0
    %173 = vmatprep.subr.mxu0 0.0
    %174 = vmatpush1.msra.mxu0 0.0
    %175 = vmatprep.subr.mxu0 0.0
    %176 = vmatpush1.msra.mxu0 0.0
    %177 = vmatprep.subr.mxu0 0.0
    %178 = vmatpush1.msra.mxu0 0.0
    %179 = vmatprep.subr.mxu0 0.0
    %180 = vmatpush1.msra.mxu0 0.0
    %181 = vmatprep.subr.mxu0 0.0
    %182 = vmatpush1.msra.mxu0 0.0
    %183 = vmatprep.subr.mxu0 0.0
    %184 = vmatpush1.msra.mxu0 0.0
    %185 = vmatprep.subr.mxu0 0.0
    %186 = vmatpush1.msra.mxu0 0.0
    %187 = vmatprep.subr.mxu0 0.0
    %188 = vmatpush1.msra.mxu0 0.0
    %189 = vmatprep.subr.mxu0 0.0
    %190 = vmatpush1.msra.mxu0 0.0
    %191 = vmatprep.subr.mxu0 0.0
    %192 = vmatpush1.msra.mxu0 0.0
    %193 = vmatprep.subr.mxu0 0.0
    %194 = vmatpush1.msra.mxu0 0.0
    %195 = vmatprep.subr.mxu0 0.0
    %196 = vmatpush1.msra.mxu0 0.0
    %197 = vmatprep.subr.mxu0 0.0
    %198 = vmatpush1.msra.mxu0 0.0
    %199 = vmatprep.subr.mxu0 0.0
    %200 = vmatpush1.msra.mxu0 0.0
    %201 = vmatprep.subr.mxu0 0.0
    %202 = vmatpush1.msra.mxu0 0.0
    %203 = vmatprep.subr.mxu0 0.0
    %204 = vmatpush1.msra.mxu0 0.0
    %205 = vmatprep.subr.mxu0 0.0
    %206 = vmatpush1.msra.mxu0 0.0
    %207 = vmatprep.subr.mxu0 0.0
    %208 = vmatpush1.msra.mxu0 0.0
    %209 = vmatprep.subr.mxu0 0.0
    %210 = vmatpush1.msra.mxu0 0.0
    %211 = vmatprep.subr.mxu0 0.0
    %212 = vmatpush1.msra.mxu0 0.0
    %213 = vmatprep.subr.mxu0 0.0
    %214 = vmatpush1.msra.mxu0 0.0
    %215 = vmatprep.subr.mxu0 0.0
    %216 = vmatpush1.msra.mxu0 0.0
    %217 = vmatprep.subr.mxu0 0.0
    %218 = vmatpush1.msra.mxu0 0.0
    %219 = vmatprep.subr.mxu0 0.0
    %220 = vmatpush1.msra.mxu0 0.0
    %221 = vmatprep.subr.mxu0 0.0
    %222 = vmatpush1.msra.mxu0 0.0
    %223 = vmatprep.subr.mxu0 0.0
    %224 = vmatpush1.msra.mxu0 0.0
    %225 = vmatprep.subr.mxu0 0.0
    %226 = vmatpush1.msra.mxu0 0.0
    %227 = vmatprep.mubr.f32.mxu0 0.0
    %228 = vmatmul.mubr.f32.gmra.mrb[0].mxu0 %v68
    %v229 = vpop.f32.mrb[0].mxu0
    %v230 = vadd.f32 %v64, %v229
    %v231 = vpop.f32.mrb[0].mxu0
    %232 = vmatprep.mubr.f32.mxu0 0.0
    %233 = vmatmul.mubr.f32.gmra.mrb[0].mxu0 %v71
    %v234 = vpop.f32.mrb[0].mxu0
    %v235 = vadd.f32 %v64, %v234
    %v236 = vpop.f32.mrb[0].mxu0
    %237 = vmatprep.mubr.f32.mxu0 0.0
    %238 = vmatmul.mubr.f32.gmra.mrb[0].mxu0 %v74
    %v239 = vpop.f32.mrb[0].mxu0
    %v240 = vadd.f32 %v64, %v239
    %v241 = vpop.f32.mrb[0].mxu0
    %242 = vmatprep.mubr.f32.mxu0 0.0
    %243 = vmatmul.mubr.f32.gmra.mrb[0].mxu0 %v77
    %v244 = vpop.f32.mrb[0].mxu0
    %v245 = vadd.f32 %v64, %v244
    %v246 = vpop.f32.mrb[0].mxu0
    %247 = vmatprep.mubr.f32.mxu0 0.0
    %248 = vmatmul.mubr.f32.gmra.mrb[0].mxu0 %v80
    %v249 = vpop.f32.mrb[0].mxu0
    %v250 = vadd.f32 %v64, %v249
    %v251 = vpop.f32.mrb[0].mxu0
    %252 = vmatprep.mubr.f32.mxu0 0.0
    %253 = vmatmul.mubr.f32.gmra.mrb[0].mxu0 %v83
    %v254 = vpop.f32.mrb[0].mxu0
    %v255 = vadd.f32 %v64, %v254
    %v256 = vpop.f32.mrb[0].mxu0
    %257 = vmatprep.mubr.f32.mxu0 0.0
    %258 = vmatmul.mubr.f32.gmra.mrb[0].mxu0 %v86
    %v259 = vpop.f32.mrb[0].mxu0
    %v260 = vadd.f32 %v64, %v259
    %v261 = vpop.f32.mrb[0].mxu0
    %262 = vmatprep.mubr.f32.mxu0 0.0
    %263 = vmatmul.mubr.f32.gmra.mrb[0].mxu0 %v89
    %v264 = vpop.f32.mrb[0].mxu0
    %v265 = vadd.f32 %v64, %v264
    %v266 = vpop.f32.mrb[0].mxu0
    %267 = vmatprep.mubr.f32.mxu0 0.0
    %268 = vmatmul.mubr.f32.gmra.mrb[0].mxu0 %v92
    %v269 = vpop.f32.mrb[0].mxu0
    %v270 = vadd.f32 %v64, %v269
    %v271 = vpop.f32.mrb[0].mxu0
    %272 = vmatprep.mubr.f32.mxu0 0.0
    %273 = vmatmul.mubr.f32.gmra.mrb[0].mxu0 %v95
    %v274 = vpop.f32.mrb[0].mxu0
    %v275 = vadd.f32 %v64, %v274
    %v276 = vpop.f32.mrb[0].mxu0
    %277 = vmatprep.mubr.f32.mxu0 0.0
    %278 = vmatmul.mubr.f32.gmra.mrb[0].mxu0 %v98
    %v279 = vpop.f32.mrb[0].mxu0
    %v280 = vadd.f32 %v64, %v279
    %v281 = vpop.f32.mrb[0].mxu0
    %282 = vmatprep.mubr.f32.mxu0 0.0
    %283 = vmatmul.mubr.f32.gmra.mrb[0].mxu0 %v101
    %v284 = vpop.f32.mrb[0].mxu0
    %v285 = vadd.f32 %v64, %v284
    %v286 = vpop.f32.mrb[0].mxu0
    %287 = vmatprep.mubr.f32.mxu0 0.0
    %288 = vmatmul.mubr.f32.gmra.mrb[0].mxu0 %v104
    %v289 = vpop.f32.mrb[0].mxu0
    %v290 = vadd.f32 %v64, %v289
    %v291 = vpop.f32.mrb[0].mxu0
    %292 = vmatprep.mubr.f32.mxu0 0.0
    %293 = vmatmul.mubr.f32.gmra.mrb[0].mxu0 %v107
    %v294 = vpop.f32.mrb[0].mxu0
    %v295 = vadd.f32 %v64, %v294
    %v296 = vpop.f32.mrb[0].mxu0
    %297 = vmatprep.mubr.f32.mxu0 0.0
    %298 = vmatmul.mubr.f32.gmra.mrb[0].mxu0 %v110
    %v299 = vpop.f32.mrb[0].mxu0
    %v300 = vadd.f32 %v64, %v299
    %v301 = vpop.f32.mrb[0].mxu0
    %302 = vmatprep.mubr.f32.mxu0 0.0
    %303 = vmatmul.mubr.f32.gmra.mrb[0].mxu0 %v113
    %v304 = vpop.f32.mrb[0].mxu0
    %v305 = vadd.f32 %v64, %v304
    %v306 = vpop.f32.mrb[0].mxu0
    %307 = vmatprep.mubr.f32.mxu0 0.0
    %308 = vmatmul.mubr.f32.gmra.mrb[0].mxu0 %v116
    %v309 = vpop.f32.mrb[0].mxu0
    %v310 = vadd.f32 %v64, %v309
    %v311 = vpop.f32.mrb[0].mxu0
    %312 = vmatprep.mubr.f32.mxu0 0.0
    %313 = vmatmul.mubr.f32.gmra.mrb[0].mxu0 %v119
    %v314 = vpop.f32.mrb[0].mxu0
    %v315 = vadd.f32 %v64, %v314
    %v316 = vpop.f32.mrb[0].mxu0
    %317 = vmatprep.mubr.f32.mxu0 0.0
    %318 = vmatmul.mubr.f32.gmra.mrb[0].mxu0 %v122
    %v319 = vpop.f32.mrb[0].mxu0
    %v320 = vadd.f32 %v64, %v319
    %v321 = vpop.f32.mrb[0].mxu0
    %322 = vmatprep.mubr.f32.mxu0 0.0
    %323 = vmatmul.mubr.f32.gmra.mrb[0].mxu0 %v125
    %v324 = vpop.f32.mrb[0].mxu0
    %v325 = vadd.f32 %v64, %v324
    %v326 = vpop.f32.mrb[0].mxu0
    %327 = vmatprep.mubr.f32.mxu0 0.0
    %328 = vmatmul.mubr.f32.gmra.mrb[0].mxu0 %v128
    %v329 = vpop.f32.mrb[0].mxu0
    %v330 = vadd.f32 %v64, %v329
    %v331 = vpop.f32.mrb[0].mxu0
    %332 = vmatprep.mubr.f32.mxu0 0.0
    %333 = vmatmul.mubr.f32.gmra.mrb[0].mxu0 %v131
    %v334 = vpop.f32.mrb[0].mxu0
    %v335 = vadd.f32 %v64, %v334
    %v336 = vpop.f32.mrb[0].mxu0
    %337 = vmatprep.mubr.f32.mxu0 0.0
    %338 = vmatmul.mubr.f32.gmra.mrb[0].mxu0 %v134
    %v339 = vpop.f32.mrb[0].mxu0
    %v340 = vadd.f32 %v64, %v339
    %v341 = vpop.f32.mrb[0].mxu0
    %342 = vmatprep.mubr.f32.mxu0 0.0
    %343 = vmatmul.mubr.f32.gmra.mrb[0].mxu0 %v137
    %v344 = vpop.f32.mrb[0].mxu0
    %v345 = vadd.f32 %v64, %v344
    %v346 = vpop.f32.mrb[0].mxu0
    %347 = vmatprep.mubr.f32.mxu0 0.0
    %348 = vmatmul.mubr.f32.gmra.mrb[0].mxu0 %v140
    %v349 = vpop.f32.mrb[0].mxu0
    %v350 = vadd.f32 %v64, %v349
    %v351 = vpop.f32.mrb[0].mxu0
    %352 = vmatprep.mubr.f32.mxu0 0.0
    %353 = vmatmul.mubr.f32.gmra.mrb[0].mxu0 %v143
    %v354 = vpop.f32.mrb[0].mxu0
    %v355 = vadd.f32 %v64, %v354
    %v356 = vpop.f32.mrb[0].mxu0
    %357 = vmatprep.mubr.f32.mxu0 0.0
    %358 = vmatmul.mubr.f32.gmra.mrb[0].mxu0 %v146
    %v359 = vpop.f32.mrb[0].mxu0
    %v360 = vadd.f32 %v64, %v359
    %v361 = vpop.f32.mrb[0].mxu0
    %362 = vmatprep.mubr.f32.mxu0 0.0
    %363 = vmatmul.mubr.f32.gmra.mrb[0].mxu0 %v149
    %v364 = vpop.f32.mrb[0].mxu0
    %v365 = vadd.f32 %v64, %v364
    %v366 = vpop.f32.mrb[0].mxu0
    %367 = vmatprep.mubr.f32.mxu0 0.0
    %368 = vmatmul.mubr.f32.gmra.mrb[0].mxu0 %v152
    %v369 = vpop.f32.mrb[0].mxu0
    %v370 = vadd.f32 %v64, %v369
    %v371 = vpop.f32.mrb[0].mxu0
    %372 = vmatprep.mubr.f32.mxu0 0.0
    %373 = vmatmul.mubr.f32.gmra.mrb[0].mxu0 %v155
    %v374 = vpop.f32.mrb[0].mxu0
    %v375 = vadd.f32 %v64, %v374
    %v376 = vpop.f32.mrb[0].mxu0
    %377 = vmatprep.mubr.f32.mxu0 0.0
    %378 = vmatmul.mubr.f32.gmra.mrb[0].mxu0 %v158
    %v379 = vpop.f32.mrb[0].mxu0
    %v380 = vadd.f32 %v64, %v379
    %v381 = vpop.f32.mrb[0].mxu0
    %382 = vmatprep.mubr.f32.mxu0 0.0
    %383 = vmatmul.mubr.f32.gmra.mrb[0].mxu0 %v161
    %v384 = vpop.f32.mrb[0].mxu0
    %v385 = vadd.f32 %v64, %v384
    %v386 = vpop.f32.mrb[0].mxu0
    %387 = vdwg.mxu0
    %v388 = vmax.f32 %v230, 0.0
    %v389 = vmax.f32 %v235, 0.0
    %v390 = vmax.f32 %v240, 0.0
    %v391 = vmax.f32 %v245, 0.0
    %v392 = vmax.f32 %v250, 0.0
    %v393 = vmax.f32 %v255, 0.0
    %v394 = vmax.f32 %v260, 0.0
    %v395 = vmax.f32 %v265, 0.0
    %v396 = vmax.f32 %v270, 0.0
    %v397 = vmax.f32 %v275, 0.0
    %v398 = vmax.f32 %v280, 0.0
    %v399 = vmax.f32 %v285, 0.0
    %v400 = vmax.f32 %v290, 0.0
    %v401 = vmax.f32 %v295, 0.0
    %v402 = vmax.f32 %v300, 0.0
    %v403 = vmax.f32 %v305, 0.0
    %v404 = vmax.f32 %v310, 0.0
    %v405 = vmax.f32 %v315, 0.0
    %v406 = vmax.f32 %v320, 0.0
    %v407 = vmax.f32 %v325, 0.0
    %v408 = vmax.f32 %v330, 0.0
    %v409 = vmax.f32 %v335, 0.0
    %v410 = vmax.f32 %v340, 0.0
    %v411 = vmax.f32 %v345, 0.0
    %v412 = vmax.f32 %v350, 0.0
    %v413 = vmax.f32 %v355, 0.0
    %v414 = vmax.f32 %v360, 0.0
    %v415 = vmax.f32 %v365, 0.0
    %v416 = vmax.f32 %v370, 0.0
    %v417 = vmax.f32 %v375, 0.0
    %v418 = vmax.f32 %v380, 0.0
    %v419 = vmax.f32 %v385, 0.0
    %420 = vxpose.xlu0.b32.start [1/16] %v388, 128
    %421 = vxpose.xlu0.b32.cont [2/16] %v389, 128
    %422 = vxpose.xlu0.b32.cont [3/16] %v390, 128
    %423 = vxpose.xlu0.b32.cont [4/16] %v391, 128
    %424 = vxpose.xlu0.b32.cont [5/16] %v392, 128
    %425 = vxpose.xlu0.b32.cont [6/16] %v393, 128
    %426 = vxpose.xlu0.b32.cont [7/16] %v394, 128
    %427 = vxpose.xlu0.b32.cont [8/16] %v395, 128
    %428 = vxpose.xlu0.b32.cont [9/16] %v396, 128
    %429 = vxpose.xlu0.b32.cont [10/16] %v397, 128
    %430 = vxpose.xlu0.b32.cont [11/16] %v398, 128
    %431 = vxpose.xlu0.b32.cont [12/16] %v399, 128
    %432 = vxpose.xlu0.b32.cont [13/16] %v400, 128
    %433 = vxpose.xlu0.b32.cont [14/16] %v401, 128
    %434 = vxpose.xlu0.b32.cont [15/16] %v402, 128
    %435 = vxpose.xlu0.b32.end [16/16] %v403, 128
    %v436 = vpop.trf.xlu0
    %v437 = vpop.trf.xlu0
    %v438 = vpop.trf.xlu0
    %v439 = vpop.trf.xlu0
    %v440 = vpop.trf.xlu0
    %v441 = vpop.trf.xlu0
    %v442 = vpop.trf.xlu0
    %v443 = vpop.trf.xlu0
    %v444 = vpop.trf.xlu0
    %v445 = vpop.trf.xlu0
    %v446 = vpop.trf.xlu0
    %v447 = vpop.trf.xlu0
    %v448 = vpop.trf.xlu0
    %v449 = vpop.trf.xlu0
    %v450 = vpop.trf.xlu0
    %v451 = vpop.trf.xlu0
    %452 = vxpose.xlu0.b32.start [1/16] %v404, 128
    %453 = vxpose.xlu0.b32.cont [2/16] %v405, 128
    %454 = vxpose.xlu0.b32.cont [3/16] %v406, 128
    %455 = vxpose.xlu0.b32.cont [4/16] %v407, 128
    %456 = vxpose.xlu0.b32.cont [5/16] %v408, 128
    %457 = vxpose.xlu0.b32.cont [6/16] %v409, 128
    %458 = vxpose.xlu0.b32.cont [7/16] %v410, 128
    %459 = vxpose.xlu0.b32.cont [8/16] %v411, 128
    %460 = vxpose.xlu0.b32.cont [9/16] %v412, 128
    %461 = vxpose.xlu0.b32.cont [10/16] %v413, 128
    %462 = vxpose.xlu0.b32.cont [11/16] %v414, 128
    %463 = vxpose.xlu0.b32.cont [12/16] %v415, 128
    %464 = vxpose.xlu0.b32.cont [13/16] %v416, 128
    %465 = vxpose.xlu0.b32.cont [14/16] %v417, 128
    %466 = vxpose.xlu0.b32.cont [15/16] %v418, 128
    %467 = vxpose.xlu0.b32.end [16/16] %v419, 128
    %v468 = vpop.trf.xlu0
    %v469 = vpop.trf.xlu0
    %v470 = vpop.trf.xlu0
    %v471 = vpop.trf.xlu0
    %v472 = vpop.trf.xlu0
    %v473 = vpop.trf.xlu0
    %v474 = vpop.trf.xlu0
    %v475 = vpop.trf.xlu0
    %v476 = vpop.trf.xlu0
    %v477 = vpop.trf.xlu0
    %v478 = vpop.trf.xlu0
    %v479 = vpop.trf.xlu0
    %v480 = vpop.trf.xlu0
    %v481 = vpop.trf.xlu0
    %v482 = vpop.trf.xlu0
    %v483 = vpop.trf.xlu0
    %v484 = vld [vmem:[%s3] sm:$0xff]
    %v485 = vld [vmem:[%s3 + $0x8] sm:$0xff]
    %v486 = vld [vmem:[%s3 + $0x10] sm:$0xff]
    %v487 = vld [vmem:[%s3 + $0x18] sm:$0xff]
    %v488 = vld [vmem:[%s3 + $0x20] sm:$0xff]
    %v489 = vld [vmem:[%s3 + $0x28] sm:$0xff]
    %v490 = vld [vmem:[%s3 + $0x30] sm:$0xff]
    %v491 = vld [vmem:[%s3 + $0x38] sm:$0xff]
    %v492 = vld [vmem:[%s3 + $0x40] sm:$0xff]
    %v493 = vld [vmem:[%s3 + $0x48] sm:$0xff]
    %v494 = vld [vmem:[%s3 + $0x50] sm:$0xff]
    %v495 = vld [vmem:[%s3 + $0x58] sm:$0xff]
    %v496 = vld [vmem:[%s3 + $0x60] sm:$0xff]
    %v497 = vld [vmem:[%s3 + $0x68] sm:$0xff]
    %v498 = vld [vmem:[%s3 + $0x70] sm:$0xff]
    %v499 = vld [vmem:[%s3 + $0x78] sm:$0xff]
    %501 = vset.pattern.permute.xlu0 0
    %502 = vperm.xlu0 %501, %v484
    %v503 = vpop.permute.xlu0 %502
    %506 = vset.pattern.permute.xlu0 0
    %507 = vperm.xlu0 %506, %v485
    %v508 = vpop.permute.xlu0 %507
    %511 = vset.pattern.permute.xlu0 0
    %512 = vperm.xlu0 %511, %v486
    %v513 = vpop.permute.xlu0 %512
    %516 = vset.pattern.permute.xlu0 0
    %517 = vperm.xlu0 %516, %v487
    %v518 = vpop.permute.xlu0 %517
    %521 = vset.pattern.permute.xlu0 0
    %522 = vperm.xlu0 %521, %v488
    %v523 = vpop.permute.xlu0 %522
    %526 = vset.pattern.permute.xlu0 0
    %527 = vperm.xlu0 %526, %v489
    %v528 = vpop.permute.xlu0 %527
    %531 = vset.pattern.permute.xlu0 0
    %532 = vperm.xlu0 %531, %v490
    %v533 = vpop.permute.xlu0 %532
    %536 = vset.pattern.permute.xlu0 0
    %537 = vperm.xlu0 %536, %v491
    %v538 = vpop.permute.xlu0 %537
    %541 = vset.pattern.permute.xlu0 0
    %542 = vperm.xlu0 %541, %v492
    %v543 = vpop.permute.xlu0 %542
    %546 = vset.pattern.permute.xlu0 0
    %547 = vperm.xlu0 %546, %v493
    %v548 = vpop.permute.xlu0 %547
    %551 = vset.pattern.permute.xlu0 0
    %552 = vperm.xlu0 %551, %v494
    %v553 = vpop.permute.xlu0 %552
    %556 = vset.pattern.permute.xlu0 0
    %557 = vperm.xlu0 %556, %v495
    %v558 = vpop.permute.xlu0 %557
    %561 = vset.pattern.permute.xlu0 0
    %562 = vperm.xlu0 %561, %v496
    %v563 = vpop.permute.xlu0 %562
    %566 = vset.pattern.permute.xlu0 0
    %567 = vperm.xlu0 %566, %v497
    %v568 = vpop.permute.xlu0 %567
    %571 = vset.pattern.permute.xlu0 0
    %572 = vperm.xlu0 %571, %v498
    %v573 = vpop.permute.xlu0 %572
    %576 = vset.pattern.permute.xlu0 0
    %577 = vperm.xlu0 %576, %v499
    %v578 = vpop.permute.xlu0 %577
    %v580 = vmul.f32 %v436, %v503
    %v581 = vmul.f32 %v468, %v503
    %v582 = vmul.f32 %v437, %v508
    %v583 = vmul.f32 %v469, %v508
    %v584 = vmul.f32 %v438, %v513
    %v585 = vmul.f32 %v470, %v513
    %v586 = vmul.f32 %v439, %v518
    %v587 = vmul.f32 %v471, %v518
    %v588 = vmul.f32 %v440, %v523
    %v589 = vmul.f32 %v472, %v523
    %v590 = vmul.f32 %v441, %v528
    %v591 = vmul.f32 %v473, %v528
    %v592 = vmul.f32 %v442, %v533
    %v593 = vmul.f32 %v474, %v533
    %v594 = vmul.f32 %v443, %v538
    %v595 = vmul.f32 %v475, %v538
    %v596 = vmul.f32 %v444, %v543
    %v597 = vmul.f32 %v476, %v543
    %v598 = vmul.f32 %v445, %v548
    %v599 = vmul.f32 %v477, %v548
    %v600 = vmul.f32 %v446, %v553
    %v601 = vmul.f32 %v478, %v553
    %v602 = vmul.f32 %v447, %v558
    %v603 = vmul.f32 %v479, %v558
    %v604 = vmul.f32 %v448, %v563
    %v605 = vmul.f32 %v480, %v563
    %v606 = vmul.f32 %v449, %v568
    %v607 = vmul.f32 %v481, %v568
    %v608 = vmul.f32 %v450, %v573
    %v609 = vmul.f32 %v482, %v573
    %v610 = vmul.f32 %v451, %v578
    %v611 = vmul.f32 %v483, %v578
    %v612 = vadd.f32 %v580, %v582
    %v613 = vadd.f32 %v612, %v584
    %v614 = vadd.f32 %v613, %v586
    %v615 = vadd.f32 %v614, %v588
    %v616 = vadd.f32 %v615, %v590
    %v617 = vadd.f32 %v616, %v592
    %v618 = vadd.f32 %v617, %v594
    %v619 = vadd.f32 %v618, %v596
    %v620 = vadd.f32 %v619, %v598
    %v621 = vadd.f32 %v620, %v600
    %v622 = vadd.f32 %v621, %v602
    %v623 = vadd.f32 %v622, %v604
    %v624 = vadd.f32 %v623, %v606
    %v625 = vadd.f32 %v624, %v608
    %v626 = vadd.f32 %v625, %v610
    %v627 = vrot.slane %v626, 4
    %v628 = vadd.f32 %v626, %v627
    %v629 = vrot.slane %v628, 2
    %v630 = vadd.f32 %v628, %v629
    %v631 = vrot.slane %v630, 1
    %v632 = vadd.f32 %v630, %v631
    %v633 = vadd.f32 %v581, %v583
    %v634 = vadd.f32 %v633, %v585
    %v635 = vadd.f32 %v634, %v587
    %v636 = vadd.f32 %v635, %v589
    %v637 = vadd.f32 %v636, %v591
    %v638 = vadd.f32 %v637, %v593
    %v639 = vadd.f32 %v638, %v595
    %v640 = vadd.f32 %v639, %v597
    %v641 = vadd.f32 %v640, %v599
    %v642 = vadd.f32 %v641, %v601
    %v643 = vadd.f32 %v642, %v603
    %v644 = vadd.f32 %v643, %v605
    %v645 = vadd.f32 %v644, %v607
    %v646 = vadd.f32 %v645, %v609
    %v647 = vadd.f32 %v646, %v611
    %v648 = vrot.slane %v647, 4
    %v649 = vadd.f32 %v647, %v648
    %v650 = vrot.slane %v649, 2
    %v651 = vadd.f32 %v649, %v650
    %v652 = vrot.slane %v651, 1
    %v653 = vadd.f32 %v651, %v652
    %v654 = vld [vmem:[#allocation2] sm:$0x1]
    %656 = vset.pattern.permute.xlu0 0
    %657 = vperm.xlu0 %656, %v654
    %v658 = vpop.permute.xlu0 %657
    %v660 = vlaneseq
    %v661 = vshrl.u32 %v660, 7
    %v662 = vsub.s32 0, %v661
    %v663 = vrot.slane %v658, %v662
    %v664 = vadd.f32 %v632, %v663
    %v665 = vadd.f32 %v653, %v663
    %v668 = vcombine.low %v664, %v665
    %v670 = vunpack.c.l.s4 1966171168
    %v671 = vunpack.c.0.s8 %v670
    %v672 = vlaneseq
    %v673 = vshrl.u32 %v672, 7
    %v674 = vsub.s32 %v671, %v673
    %v675 = vrot.slane %v668, %v674
    %v677 = vunpack.c.l.s4 1966171168
    %v678 = vunpack.c.0.s8 %v677
    %v679 = vlaneseq
    %v680 = vshrl.u32 %v679, 7
    %v681 = vsub.s32 %v678, %v680
    %v682 = vrot.slane %v675, %v681
    %v684 = vlaneseq
    %vm685 = vcmp.ge.s32.totalorder %v684, 0
    %vm686 = vcmp.lt.s32.totalorder %v684, 256
    %vm687 = vmand %vm685, %vm686
    %688 = vst.msk [vmem:[#allocation3] sm:$0x3] %vm687, %v682
    // Predicated region
    $region22: #{tpu_custom_call.1} parent=1 // pred_check
      _
    $region23: #{tpu_custom_call.1} parent=1 // pred_check_branch
      %690 = sbr.rel (0) target = $region25
    $region24: #{tpu_custom_call.1} parent=1 // pred_region
      %s692 = ssub.s32 32, 32
      %693 = vsyncadd [#allocation4], %s692
      %s695 = sshll.u32 [#allocation3], 4
      %s696 = int_to_ptr.vmem [resolvable:$true] %s695
      %698 = dma.vmem_to_hbm [thread:$0]  %s696, 32, %s5, [#allocation4]
    $region25: #{tpu_custom_call.1} parent=1 // pred_fallthru
      _
    // Predicated region
    $region26: #{tpu_custom_call.1} parent=1 // pred_check
      _
    $region27: #{tpu_custom_call.1} parent=1 // pred_check_branch
      %700 = sbr.rel (0) target = $region29
    $region28: #{tpu_custom_call.1} parent=1 // pred_region
      %701 = dma.done [#allocation4], 32
    $region29: #{tpu_custom_call.1} parent=1 // pred_fallthru
      _
    %702 = vsyncpa [#allocation4], 1

</llo_original>
